<compile_context>
chip_gen: v7x
topology: tpu7x:2x2x1
jax: 0.10.0
libtpu: 0.0.40
codegen_flags: <defaults>
</compile_context>

<pallas_src>
import functools

import jax
import jax.numpy as jnp
from jax.experimental import pallas as pl
from jax.experimental.pallas import tpu as pltpu


_LANE = 128
# 4096-row tiles: per-step DMA (~2.5 MB) >> ~0.35 us step overhead, while the
# double-buffered tiles + compiler-materialized f32 intermediates stay ~11 MB,
# well inside v7x's 32 MiB scoped VMEM (v5e/v6e have far more headroom).
_MAX_BATCH_TILE = 4096
# Below this, a single full-array block is used (no pipelining win to be had).
_SINGLE_BLOCK_MAX = 512


def _round_up(x: int, m: int) -> int:
    return ((x + m - 1) // m) * m


def _pick_tile(batch: int) -> int:
    """Batch tile: full block for small B; otherwise >=2 parallel steps (v7x
    megacore) capped at _MAX_BATCH_TILE rows, rounded to 16 for bf16 sublane
    packing."""
    if batch <= _SINGLE_BLOCK_MAX:
        return batch
    half = -(-batch // 2)
    return min(_MAX_BATCH_TILE, _round_up(half, 16))


def _fused_heads_kernel(x_ref, w1_ref, w23_ref, b_ref, out_ref, *, compute_dtype):
    """Fused actor+critic 3-layer MLP heads.

    x    : (TB, obs_dim)  observation rows (f32)
    w1   : (obs_dim, PAD) actor|critic L1 weights side by side (compute_dtype)
    w23  : (2, PAD, PAD)  [0] = block-diag L2, [1] = block-diag L3 (compute_dtype)
    b    : (3, PAD)       rows = packed b1, b2, b3 (always f32)
    out  : (TB, PAD)      cols [0:A] = actor logit, [A:2A] = critic q_value
                          (dtype = compute_dtype)
    """
    cd = compute_dtype
    f32 = jnp.float32

    x = x_ref[...].astype(cd)
    # L1: one lane-dense matmul covering both heads (weights already in cd).
    h1 = jnp.dot(x, w1_ref[...], preferred_element_type=f32)
    h1 = jnp.maximum(h1 + b_ref[0:1, :], 0.0)          # bias / ReLU kept in f32
    # L2: block-diagonal (actor block , critic block) -> one 128-wide MXU push.
    h2 = jnp.dot(h1.astype(cd), w23_ref[0], preferred_element_type=f32)
    h2 = jnp.maximum(h2 + b_ref[1:2, :], 0.0)
    # L3: block structure routes actor -> cols[0:A], critic -> cols[A:2A].
    y = jnp.dot(h2.astype(cd), w23_ref[1], preferred_element_type=f32)
    y = y + b_ref[2:3, :]
    out_ref[...] = y.astype(out_ref.dtype)


@functools.partial(jax.jit, static_argnames=("compute_dtype",))
def _fused_forward(x, w1, w23, b, compute_dtype=jnp.bfloat16):
    B, obs_dim = x.shape
    pad = w1.shape[1]
    tb = _pick_tile(B)
    nb = pl.cdiv(B, tb)
    kernel = functools.partial(_fused_heads_kernel, compute_dtype=compute_dtype)
    return pl.pallas_call(
        kernel,
        # Output slab dtype follows compute_dtype -> bf16 writeback on the
        # perf path (the slab is the dominant HBM traffic term).
        out_shape=jax.ShapeDtypeStruct((B, pad), compute_dtype),
        grid=(nb,),
        in_specs=[
            pl.BlockSpec((tb, obs_dim), lambda i: (i, 0)),     # obs rows, tiled
            pl.BlockSpec((obs_dim, pad), lambda i: (0, 0)),    # weights stay
            pl.BlockSpec((2, pad, pad), lambda i: (0, 0, 0)),  #   VMEM-resident
            pl.BlockSpec((3, pad), lambda i: (0, 0)),          #   across steps
        ],
        out_specs=pl.BlockSpec((tb, pad), lambda i: (i, 0)),   # lane-dense slab
        compiler_params=pltpu.CompilerParams(
            dimension_semantics=("parallel",)),                # 2 TCs on v7x
    )(x, w1, w23, b)


def _init_linear(key, fan_in, fan_out):
    # Deterministic stand-in for PyTorch's default uniform(-1/sqrt(fan_in), ...).
    kw, kb = jax.random.split(key)
    bound = 1.0 / jnp.sqrt(jnp.float32(fan_in))
    w = jax.random.uniform(kw, (fan_in, fan_out), jnp.float32, -bound, bound)
    b = jax.random.uniform(kb, (fan_out,), jnp.float32, -bound, bound)
    return w, b


class DiscreteQACPallas:
    """Pallas DiscreteQAC (vector obs_shape, twin_critic=False, Identity encoders).

    compute_dtype=jnp.bfloat16 is the recommended perf path on v5e/v6e/v7x
    (f32 matmuls are emulated via multiple bf16 MXU passes and double the
    memory traffic); compute_dtype=jnp.float32 is a correctness-only mode that
    reproduces the PyTorch module numerics exactly.

    For training paths that need both heads on the same batch, call
    compute_actor_critic (one fused launch) rather than compute_actor +
    compute_critic, which would each recompute the fused slab.
    """

    mode = ("compute_actor", "compute_critic")

    def __init__(self, obs_shape: int, action_shape: int,
                 twin_critic: bool = False,
                 actor_head_hidden_size: int = 64,
                 critic_head_hidden_size: int = 64,
                 compute_dtype=jnp.bfloat16,
                 seed: int = 0):
        # TODO(synk): twin_critic=True, 3-D image obs (ConvEncoder) and
        # share_encoder branches are not wired up in this synthetic kernel.
        assert not twin_critic, "twin_critic not supported in this Pallas port"
        self.obs_shape = obs_shape
        self.action_shape = action_shape
        self.compute_dtype = compute_dtype

        Ha, Hc, A = actor_head_hidden_size, critic_head_hidden_size, action_shape
        key = jax.random.PRNGKey(seed)
        keys = jax.random.split(key, 6)
        # Actor head: Linear(obs,Ha)+ReLU -> Linear(Ha,Ha)+ReLU -> Linear(Ha,A)
        self.a_w1, self.a_b1 = _init_linear(keys[0], obs_shape, Ha)
        self.a_w2, self.a_b2 = _init_linear(keys[1], Ha, Ha)
        self.a_w3, self.a_b3 = _init_linear(keys[2], Ha, A)
        # Critic head: same structure, independent weights.
        self.c_w1, self.c_b1 = _init_linear(keys[3], obs_shape, Hc)
        self.c_w2, self.c_b2 = _init_linear(keys[4], Hc, Hc)
        self.c_w3, self.c_b3 = _init_linear(keys[5], Hc, A)

        # --- pack everything into 3 lane-dense buffers (done once, on host) ---
        pad = max(_round_up(Ha + Hc, _LANE), _round_up(2 * A, _LANE))
        self._pad = pad

        w1 = jnp.zeros((obs_shape, pad), jnp.float32)
        w1 = w1.at[:, :Ha].set(self.a_w1).at[:, Ha:Ha + Hc].set(self.c_w1)

        w2 = jnp.zeros((pad, pad), jnp.float32)
        w2 = w2.at[:Ha, :Ha].set(self.a_w2).at[Ha:Ha + Hc, Ha:Ha + Hc].set(self.c_w2)

        w3 = jnp.zeros((pad, pad), jnp.float32)
        w3 = w3.at[:Ha, :A].set(self.a_w3).at[Ha:Ha + Hc, A:2 * A].set(self.c_w3)

        b = jnp.zeros((3, pad), jnp.float32)
        b = b.at[0, :Ha].set(self.a_b1).at[0, Ha:Ha + Hc].set(self.c_b1)
        b = b.at[1, :Ha].set(self.a_b2).at[1, Ha:Ha + Hc].set(self.c_b2)
        b = b.at[2, :A].set(self.a_b3).at[2, A:2 * A].set(self.c_b3)

        # Pre-cast weights to compute_dtype once (halves weight DMA + removes
        # the per-grid-step f32->bf16 cast).  Biases stay f32 for exact
        # bias/ReLU arithmetic on the f32 accumulators.
        self.w1_packed = w1.astype(compute_dtype)
        self.w23_packed = jnp.stack([w2, w3], axis=0).astype(compute_dtype)
        self.b_packed = b

    # ------------------------------------------------------------------ #
    def _run(self, x):
        return _fused_forward(x, self.w1_packed, self.w23_packed, self.b_packed,
                              compute_dtype=self.compute_dtype)

    def compute_actor_critic(self, obs):
        """Fused path: both heads from one kernel launch (preferred for training)."""
        out = self._run(obs)
        A = self.action_shape
        head = out[:, :2 * A]                 # single slab slice
        return {"logit": head[:, :A], "q_value": head[:, A:]}

    def compute_actor(self, inputs):
        action_mask = None
        if isinstance(inputs, dict):
            action_mask = inputs.get("action_mask", None)
            x = inputs["agent_state"]
        else:
            x = inputs
        out = self._run(x)                    # actor_encoder is Identity
        logit = out[:, :self.action_shape]
        if action_mask is not None:
            # Mask applied after upcasting to f32 (exact -99999999 fill).
            logit = jnp.where(action_mask == 0.0, jnp.float32(-99999999.0),
                              logit.astype(jnp.float32))
        return {"logit": logit}

    def compute_critic(self, inputs):
        if isinstance(inputs, dict):
            x = inputs["agent_state"]
        else:
            x = inputs
        out = self._run(x)                    # critic_encoder is Identity
        A = self.action_shape
        return {"q_value": out[:, A:2 * A]}

    def forward(self, inputs, mode: str):
        assert mode in self.mode, f"not support forward mode: {mode}"
        return getattr(self, mode)(inputs)


# --------------------------- plain-JAX reference --------------------------- #
def _reference_head(obs, w1, b1, w2, b2, w3, b3, compute_dtype=jnp.float32):
    cd = compute_dtype
    f32 = jnp.float32
    h1 = jnp.dot(obs.astype(cd), w1.astype(cd), preferred_element_type=f32) + b1
    h1 = jnp.maximum(h1, 0.0)
    h2 = jnp.dot(h1.astype(cd), w2.astype(cd), preferred_element_type=f32) + b2
    h2 = jnp.maximum(h2, 0.0)
    return jnp.dot(h2.astype(cd), w3.astype(cd), preferred_element_type=f32) + b3


if __name__ == "__main__":
    B, OBS, ACT = 4, 32, 6
    key = jax.random.PRNGKey(0)
    obs = jax.random.normal(key, (B, OBS), jnp.float32)

    # ---- exact-semantics path (f32 compute; matches PyTorch numerics) ----
    model = DiscreteQACPallas(OBS, ACT, compute_dtype=jnp.float32, seed=0)
    actor_out = model.forward(obs, "compute_actor")
    critic_out = model.forward(obs, "compute_critic")
    jax.block_until_ready(actor_out["logit"])
    jax.block_until_ready(critic_out["q_value"])
    assert actor_out["logit"].shape == (B, ACT)
    assert critic_out["q_value"].shape == (B, ACT)

    ref_logit = _reference_head(obs, model.a_w1, model.a_b1, model.a_w2,
                                model.a_b2, model.a_w3, model.a_b3, jnp.float32)
    ref_q = _reference_head(obs, model.c_w1, model.c_b1, model.c_w2,
                            model.c_b2, model.c_w3, model.c_b3, jnp.float32)
    assert jnp.allclose(actor_out["logit"], ref_logit, atol=1e-5, rtol=1e-5)
    assert jnp.allclose(critic_out["q_value"], ref_q, atol=1e-5, rtol=1e-5)

    # ---- action_mask dict-input branch of compute_actor ----
    mask = jnp.ones((B, ACT), jnp.float32).at[:, 0].set(0.0)
    masked = model.compute_actor({"agent_state": obs, "action_mask": mask})
    jax.block_until_ready(masked["logit"])
    assert bool(jnp.all(masked["logit"][:, 0] < -1e7))
    assert jnp.allclose(masked["logit"][:, 1:], ref_logit[:, 1:], atol=1e-5, rtol=1e-5)

    # ---- batch-grid path (grid >= 2 parallel steps), still f32-exact ----
    B_big = 1024
    obs_big = jax.random.normal(jax.random.PRNGKey(1), (B_big, OBS), jnp.float32)
    both_big = model.compute_actor_critic(obs_big)
    jax.block_until_ready(both_big["logit"])
    ref_big_logit = _reference_head(obs_big, model.a_w1, model.a_b1, model.a_w2,
                                    model.a_b2, model.a_w3, model.a_b3, jnp.float32)
    ref_big_q = _reference_head(obs_big, model.c_w1, model.c_b1, model.c_w2,
                                model.c_b2, model.c_w3, model.c_b3, jnp.float32)
    assert both_big["logit"].shape == (B_big, ACT)
    assert jnp.allclose(both_big["logit"], ref_big_logit, atol=1e-5, rtol=1e-5)
    assert jnp.allclose(both_big["q_value"], ref_big_q, atol=1e-5, rtol=1e-5)

    # ---- bf16-MXU perf path (default; bf16 weights, bf16 writeback) ----
    model_bf16 = DiscreteQACPallas(OBS, ACT, compute_dtype=jnp.bfloat16, seed=0)
    both_bf = model_bf16.compute_actor_critic(obs)
    jax.block_until_ready(both_bf["logit"])
    assert both_bf["logit"].dtype == jnp.bfloat16
    ref_logit_bf = _reference_head(obs, model_bf16.a_w1, model_bf16.a_b1,
                                   model_bf16.a_w2, model_bf16.a_b2,
                                   model_bf16.a_w3, model_bf16.a_b3, jnp.bfloat16)
    ref_q_bf = _reference_head(obs, model_bf16.c_w1, model_bf16.c_b1,
                               model_bf16.c_w2, model_bf16.c_b2,
                               model_bf16.c_w3, model_bf16.c_b3, jnp.bfloat16)
    assert jnp.allclose(both_bf["logit"].astype(jnp.float32),
                        ref_logit_bf.astype(jnp.bfloat16).astype(jnp.float32),
                        atol=2e-2, rtol=2e-2)
    assert jnp.allclose(both_bf["q_value"].astype(jnp.float32),
                        ref_q_bf.astype(jnp.bfloat16).astype(jnp.float32),
                        atol=2e-2, rtol=2e-2)

    # ---- bf16 action_mask branch: mask fill happens in f32 ----
    masked_bf = model_bf16.compute_actor({"agent_state": obs, "action_mask": mask})
    jax.block_until_ready(masked_bf["logit"])
    assert masked_bf["logit"].dtype == jnp.float32
    assert bool(jnp.all(masked_bf["logit"][:, 0] < -1e7))

    print("KERNEL_OK")
</pallas_src>

<mosaic_0001>
module attributes {stable_mosaic.version = 11 : i64} {
  func.func @_fused_heads_kernel(%arg0: i32, %arg1: memref<4x32xf32, #tpu.memory_space<vmem>>, %arg2: memref<32x128xf32, #tpu.memory_space<vmem>>, %arg3: memref<2x128x128xf32, #tpu.memory_space<vmem>>, %arg4: memref<3x128xf32, #tpu.memory_space<vmem>>, %arg5: memref<4x128xf32, #tpu.memory_space<vmem>>) attributes {dimension_semantics = [#tpu.dimension_semantics<parallel>], iteration_bounds = array<i64: 1>, scalar_prefetch = 0 : i64, scratch_operands = 0 : i64, tpu.core_type = #tpu.core_type<tc>, window_params = [{transform_indices = @transform_0, window_bounds = array<i64: 4, 32>}, {pipeline_mode = #tpu.pipeline_mode<synchronous>, transform_indices = @transform_1, window_bounds = array<i64: 32, 128>}, {pipeline_mode = #tpu.pipeline_mode<synchronous>, transform_indices = @transform_2, window_bounds = array<i64: 2, 128, 128>}, {pipeline_mode = #tpu.pipeline_mode<synchronous>, transform_indices = @transform_3, window_bounds = array<i64: 3, 128>}, {transform_indices = @transform_4, window_bounds = array<i64: 4, 128>}]} {
    %c0 = arith.constant 0 : index
    %c0_0 = arith.constant 0 : index
    %0 = vector.load %arg1[%c0, %c0_0] : memref<4x32xf32, #tpu.memory_space<vmem>>, vector<4x32xf32>
    %c0_1 = arith.constant 0 : index
    %c0_2 = arith.constant 0 : index
    %1 = vector.load %arg2[%c0_1, %c0_2] : memref<32x128xf32, #tpu.memory_space<vmem>>, vector<32x128xf32>
    %cst = arith.constant dense<0.000000e+00> : vector<4x128xf32>
    %2 = tpu.matmul %0, %1, %cst {dimension_numbers = #tpu.dot_dimension_numbers<[1], [0], [0], [1], [0, 0, 1, 1], [], []>} : vector<4x32xf32>, vector<32x128xf32>, vector<4x128xf32> -> vector<4x128xf32>
    %c0_3 = arith.constant 0 : index
    %c0_4 = arith.constant 0 : index
    %3 = vector.load %arg4[%c0_3, %c0_4] : memref<3x128xf32, #tpu.memory_space<vmem>>, vector<1x128xf32>
    %4 = vector.broadcast %3 : vector<1x128xf32> to vector<4x128xf32>
    %5 = arith.addf %2, %4 : vector<4x128xf32>
    %cst_5 = arith.constant 0.000000e+00 : f32
    %6 = vector.broadcast %cst_5 : f32 to vector<4x128xf32>
    %7 = arith.maximumf %5, %6 : vector<4x128xf32>
    %c0_6 = arith.constant 0 : index
    %c0_7 = arith.constant 0 : index
    %c0_8 = arith.constant 0 : index
    %8 = vector.load %arg3[%c0_6, %c0_7, %c0_8] : memref<2x128x128xf32, #tpu.memory_space<vmem>>, vector<1x128x128xf32>
    %9 = vector.shape_cast %8 : vector<1x128x128xf32> to vector<128x128xf32>
    %cst_9 = arith.constant dense<0.000000e+00> : vector<4x128xf32>
    %10 = tpu.matmul %7, %9, %cst_9 {dimension_numbers = #tpu.dot_dimension_numbers<[1], [0], [0], [1], [0, 0, 1, 1], [], []>} : vector<4x128xf32>, vector<128x128xf32>, vector<4x128xf32> -> vector<4x128xf32>
    %c1 = arith.constant 1 : index
    %c0_10 = arith.constant 0 : index
    %11 = vector.load %arg4[%c1, %c0_10] : memref<3x128xf32, #tpu.memory_space<vmem>>, vector<1x128xf32>
    %12 = vector.broadcast %11 : vector<1x128xf32> to vector<4x128xf32>
    %13 = arith.addf %10, %12 : vector<4x128xf32>
    %cst_11 = arith.constant 0.000000e+00 : f32
    %14 = vector.broadcast %cst_11 : f32 to vector<4x128xf32>
    %15 = arith.maximumf %13, %14 : vector<4x128xf32>
    %c1_12 = arith.constant 1 : index
    %c0_13 = arith.constant 0 : index
    %c0_14 = arith.constant 0 : index
    %16 = vector.load %arg3[%c1_12, %c0_13, %c0_14] : memref<2x128x128xf32, #tpu.memory_space<vmem>>, vector<1x128x128xf32>
    %17 = vector.shape_cast %16 : vector<1x128x128xf32> to vector<128x128xf32>
    %cst_15 = arith.constant dense<0.000000e+00> : vector<4x128xf32>
    %18 = tpu.matmul %15, %17, %cst_15 {dimension_numbers = #tpu.dot_dimension_numbers<[1], [0], [0], [1], [0, 0, 1, 1], [], []>} : vector<4x128xf32>, vector<128x128xf32>, vector<4x128xf32> -> vector<4x128xf32>
    %c2 = arith.constant 2 : index
    %c0_16 = arith.constant 0 : index
    %19 = vector.load %arg4[%c2, %c0_16] : memref<3x128xf32, #tpu.memory_space<vmem>>, vector<1x128xf32>
    %20 = vector.broadcast %19 : vector<1x128xf32> to vector<4x128xf32>
    %21 = arith.addf %18, %20 : vector<4x128xf32>
    %c0_17 = arith.constant 0 : index
    %c0_18 = arith.constant 0 : index
    %22 = vector.load %arg5[%c0_17, %c0_18] : memref<4x128xf32, #tpu.memory_space<vmem>>, vector<4x128xf32>
    tpu.vector_store %arg5[%c0_17, %c0_18], %21 {strides = array<i32>} : memref<4x128xf32, #tpu.memory_space<vmem>>, vector<4x128xf32>,
    return
  }
  func.func @transform_0(%arg0: i32) -> (i32, i32) {
    %c0_i32 = arith.constant 0 : i32
    %c0_i32_0 = arith.constant 0 : i32
    return %arg0, %c0_i32 : i32, i32
  }
  func.func @transform_1(%arg0: i32) -> (i32, i32) {
    %c0_i32 = arith.constant 0 : i32
    %c0_i32_0 = arith.constant 0 : i32
    %c0_i32_1 = arith.constant 0 : i32
    return %c0_i32, %c0_i32_0 : i32, i32
  }
  func.func @transform_2(%arg0: i32) -> (i32, i32, i32) {
    %c0_i32 = arith.constant 0 : i32
    %c0_i32_0 = arith.constant 0 : i32
    %c0_i32_1 = arith.constant 0 : i32
    %c0_i32_2 = arith.constant 0 : i32
    return %c0_i32, %c0_i32_0, %c0_i32_1 : i32, i32, i32
  }
  func.func @transform_3(%arg0: i32) -> (i32, i32) {
    %c0_i32 = arith.constant 0 : i32
    %c0_i32_0 = arith.constant 0 : i32
    %c0_i32_1 = arith.constant 0 : i32
    return %c0_i32, %c0_i32_0 : i32, i32
  }
  func.func @transform_4(%arg0: i32) -> (i32, i32) {
    %c0_i32 = arith.constant 0 : i32
    %c0_i32_0 = arith.constant 0 : i32
    return %arg0, %c0_i32 : i32, i32
  }
}

</mosaic_0001>

<llo_original>
// kernel: _fused_forward.1
$region0: #{_fused_forward.1}
  #allocation0 [shape = 'u32[]', space=smem, size = 0x4, offset = 0x4, fixed_abs, tag = 'smem constant byte address 0x4 - core index']
  #allocation1 [shape = 'u32[144,128]{1,0:T(1,128)}', space=vmem, size = 0x12000, scoped, tag = 'internal scratch']
  %s0 = inlined_call_operand.hbm [shape: f32[4,32], index: 0, kind: input, shape index: {}]
  %s1 = inlined_call_operand.hbm [shape: f32[32,128], index: 1, kind: input, shape index: {}]
  %s2 = inlined_call_operand.hbm [shape: f32[2,128,128], index: 2, kind: input, shape index: {}]
  %s3 = inlined_call_operand.vmem [shape: f32[3,128], index: 3, kind: input, shape index: {}]
  %s4 = inlined_call_operand.hbm [shape: f32[4,128], index: 4, kind: output, shape index: {}]
  %s5 = sld [smem:[#allocation0]]
  $region38: #{_fused_forward.1} parent=0
    _
  %s7 = ssub.s32 1, %s5
  %s8 = scalar_select 0, %s7, %s5
  $region1: #{_fused_forward.1} parent=0
    #allocation2 [shape = 'u8[2048]{0}', space=vmem, size = 0x800, scoped, tag = 'input window, operand 0, single buffered']
    #allocation3 [shape = 's32[1]{0}', space=sflag, size = 0x4, scoped, tag = 'scoped memory for _fused_forward.1']
    #allocation4 [shape = 's32[1]{0}', space=sflag, size = 0x4, scoped, tag = 'scoped memory for _fused_forward.1']
    #allocation5 [shape = 'u8[16384]{0}', space=vmem, size = 0x4000, scoped, tag = 'input window, operand 1, single buffered']
    #allocation6 [shape = 's32[1]{0}', space=sflag, size = 0x4, scoped, tag = 'scoped memory for _fused_forward.1']
    #allocation7 [shape = 'u8[131072]{0}', space=vmem, size = 0x20000, scoped, tag = 'input window, operand 2, single buffered']
    #allocation8 [shape = 'u8[2048]{0}', space=vmem, size = 0x800, scoped, tag = 'output window, operand 0, single buffered']
    %9 = vsyncpa [#allocation3], 0
    %10 = vsyncpa [#allocation6], 0
    %11 = vsyncpa [#allocation4], 0
    // Predicated region
    $region2: #{_fused_forward.1} parent=1 // pred_check
      _
    $region3: #{_fused_forward.1} parent=1 // pred_check_branch
      %13 = sbr.rel (0) target = $region5
    $region4: #{_fused_forward.1} parent=1 // pred_region
      %s15 = ssub.s32 64, 64
      %16 = vsyncadd [#allocation3], %s15
      %s18 = sshll.u32 [#allocation2], 4
      %s19 = int_to_ptr.vmem [resolvable:$true] %s18
      %21 = dma.hbm_to_vmem [thread:$0]  %s0, 64, %s19, [#allocation3]
    $region5: #{_fused_forward.1} parent=1 // pred_fallthru
      _
    // Predicated region
    $region6: #{_fused_forward.1} parent=1 // pred_check
      _
    $region7: #{_fused_forward.1} parent=1 // pred_check_branch
      %23 = sbr.rel (0) target = $region9
    $region8: #{_fused_forward.1} parent=1 // pred_region
      %s25 = ssub.s32 512, 512
      %26 = vsyncadd [#allocation6], %s25
      %s27 = sshll.u32 [#allocation5], 4
      %s28 = int_to_ptr.vmem [resolvable:$true] %s27
      %33 = dma.hbm_to_vmem [thread:$0]  %s1, 512, %s28, [#allocation6], 128, 128, 8
    $region9: #{_fused_forward.1} parent=1 // pred_fallthru
      _
    // Predicated region
    $region10: #{_fused_forward.1} parent=1 // pred_check
      _
    $region11: #{_fused_forward.1} parent=1 // pred_check_branch
      %35 = sbr.rel (0) target = $region13
    $region12: #{_fused_forward.1} parent=1 // pred_region
      %s37 = ssub.s32 4096, 4096
      %38 = vsyncadd [#allocation6], %s37
      %s39 = sshll.u32 [#allocation7], 4
      %s40 = int_to_ptr.vmem [resolvable:$true] %s39
      %45 = dma.hbm_to_vmem [thread:$0]  %s2, 4096, %s40, [#allocation6], 128, 128, 8
    $region13: #{_fused_forward.1} parent=1 // pred_fallthru
      _
    // Predicated region
    $region14: #{_fused_forward.1} parent=1 // pred_check
      _
    $region15: #{_fused_forward.1} parent=1 // pred_check_branch
      %47 = sbr.rel (0) target = $region17
    $region16: #{_fused_forward.1} parent=1 // pred_region
      _
    $region17: #{_fused_forward.1} parent=1 // pred_fallthru
      _
    // Predicated region
    $region18: #{_fused_forward.1} parent=1 // pred_check
      _
    $region19: #{_fused_forward.1} parent=1 // pred_check_branch
      %49 = sbr.rel (0) target = $region21
    $region20: #{_fused_forward.1} parent=1 // pred_region
      %50 = dma.done [#allocation3], 64
    $region21: #{_fused_forward.1} parent=1 // pred_fallthru
      _
    // Predicated region
    $region22: #{_fused_forward.1} parent=1 // pred_check
      _
    $region23: #{_fused_forward.1} parent=1 // pred_check_branch
      %52 = sbr.rel (0) target = $region25
    $region24: #{_fused_forward.1} parent=1 // pred_region
      %53 = dma.done [#allocation6], 512
    $region25: #{_fused_forward.1} parent=1 // pred_fallthru
      _
    // Predicated region
    $region26: #{_fused_forward.1} parent=1 // pred_check
      _
    $region27: #{_fused_forward.1} parent=1 // pred_check_branch
      %55 = sbr.rel (0) target = $region29
    $region28: #{_fused_forward.1} parent=1 // pred_region
      %56 = dma.done [#allocation6], 4096
    $region29: #{_fused_forward.1} parent=1 // pred_fallthru
      _
    %v57 = vld [vmem:[#allocation2] sm:$0xf]
    %v58 = vld [vmem:[#allocation5] sm:$0xff]
    %v59 = vld [vmem:[#allocation5 + $0x8] sm:$0xff]
    %v60 = vld [vmem:[#allocation5 + $0x10] sm:$0xff]
    %v61 = vld [vmem:[#allocation5 + $0x18] sm:$0xff]
    %v62 = vld [vmem:[%s3] sm:$0x1]
    %v63 = vlaneseq
    %v64 = vshrl.u32 %v63, 7
    %v65 = vsub.s32 0, %v64
    %v66 = vrot.slane %v62, %v65
    %vm67 = vcmask 261120
    %v69 = vsel %vm67, %v57, 0
    %71 = vmatprep.subr.mxu0 0.0
    %72 = vmatpush1.msra.mxu0 %v58
    %73 = vmatprep.subr.mxu0 0.0
    %74 = vmatpush1.msra.mxu0 %v59
    %75 = vmatprep.subr.mxu0 0.0
    %76 = vmatpush1.msra.mxu0 %v60
    %77 = vmatprep.subr.mxu0 0.0
    %78 = vmatpush1.msra.mxu0 %v61
    %79 = vmatprep.subr.mxu0 0.0
    %80 = vmatpush1.msra.mxu0 0.0
    %81 = vmatprep.subr.mxu0 0.0
    %82 = vmatpush1.msra.mxu0 0.0
    %83 = vmatprep.subr.mxu0 0.0
    %84 = vmatpush1.msra.mxu0 0.0
    %85 = vmatprep.subr.mxu0 0.0
    %86 = vmatpush1.msra.mxu0 0.0
    %87 = vmatprep.subr.mxu0 0.0
    %88 = vmatpush1.msra.mxu0 0.0
    %89 = vmatprep.subr.mxu0 0.0
    %90 = vmatpush1.msra.mxu0 0.0
    %91 = vmatprep.subr.mxu0 0.0
    %92 = vmatpush1.msra.mxu0 0.0
    %93 = vmatprep.subr.mxu0 0.0
    %94 = vmatpush1.msra.mxu0 0.0
    %95 = vmatprep.subr.mxu0 0.0
    %96 = vmatpush1.msra.mxu0 0.0
    %97 = vmatprep.subr.mxu0 0.0
    %98 = vmatpush1.msra.mxu0 0.0
    %99 = vmatprep.subr.mxu0 0.0
    %100 = vmatpush1.msra.mxu0 0.0
    %101 = vmatprep.subr.mxu0 0.0
    %102 = vmatpush1.msra.mxu0 0.0
    %103 = vmatprep.subr.mxu0 0.0
    %104 = vmatpush1.msra.mxu0 0.0
    %105 = vmatprep.subr.mxu0 0.0
    %106 = vmatpush1.msra.mxu0 0.0
    %107 = vmatprep.subr.mxu0 0.0
    %108 = vmatpush1.msra.mxu0 0.0
    %109 = vmatprep.subr.mxu0 0.0
    %110 = vmatpush1.msra.mxu0 0.0
    %111 = vmatprep.subr.mxu0 0.0
    %112 = vmatpush1.msra.mxu0 0.0
    %113 = vmatprep.subr.mxu0 0.0
    %114 = vmatpush1.msra.mxu0 0.0
    %115 = vmatprep.subr.mxu0 0.0
    %116 = vmatpush1.msra.mxu0 0.0
    %117 = vmatprep.subr.mxu0 0.0
    %118 = vmatpush1.msra.mxu0 0.0
    %119 = vmatprep.subr.mxu0 0.0
    %120 = vmatpush1.msra.mxu0 0.0
    %121 = vmatprep.subr.mxu0 0.0
    %122 = vmatpush1.msra.mxu0 0.0
    %123 = vmatprep.subr.mxu0 0.0
    %124 = vmatpush1.msra.mxu0 0.0
    %125 = vmatprep.subr.mxu0 0.0
    %126 = vmatpush1.msra.mxu0 0.0
    %127 = vmatprep.subr.mxu0 0.0
    %128 = vmatpush1.msra.mxu0 0.0
    %129 = vmatprep.subr.mxu0 0.0
    %130 = vmatpush1.msra.mxu0 0.0
    %131 = vmatprep.subr.mxu0 0.0
    %132 = vmatpush1.msra.mxu0 0.0
    %133 = vmatprep.subr.mxu0 0.0
    %134 = vmatpush1.msra.mxu0 0.0
    %135 = vmatprep.mubr.f32.mxu0 0.0
    %136 = vmatmul.mubr.f32.gmra.mrb[0].mxu0 %v69
    %v137 = vpop.f32.mrb[0].mxu0
    %v138 = vadd.f32 %v66, %v137
    %v139 = vpop.f32.mrb[0].mxu0
    %140 = vdwg.mxu0
    %v141 = vmax.f32 %v138, 0.0
    %v142 = vld [vmem:[#allocation7] sm:$0xff]
    %v143 = vld [vmem:[#allocation7 + $0x8] sm:$0xff]
    %v144 = vld [vmem:[#allocation7 + $0x10] sm:$0xff]
    %v145 = vld [vmem:[#allocation7 + $0x18] sm:$0xff]
    %v146 = vld [vmem:[#allocation7 + $0x20] sm:$0xff]
    %v147 = vld [vmem:[#allocation7 + $0x28] sm:$0xff]
    %v148 = vld [vmem:[#allocation7 + $0x30] sm:$0xff]
    %v149 = vld [vmem:[#allocation7 + $0x38] sm:$0xff]
    %v150 = vld [vmem:[#allocation7 + $0x40] sm:$0xff]
    %v151 = vld [vmem:[#allocation7 + $0x48] sm:$0xff]
    %v152 = vld [vmem:[#allocation7 + $0x50] sm:$0xff]
    %v153 = vld [vmem:[#allocation7 + $0x58] sm:$0xff]
    %v154 = vld [vmem:[#allocation7 + $0x60] sm:$0xff]
    %v155 = vld [vmem:[#allocation7 + $0x68] sm:$0xff]
    %v156 = vld [vmem:[#allocation7 + $0x70] sm:$0xff]
    %v157 = vld [vmem:[#allocation7 + $0x78] sm:$0xff]
    %v158 = vld [vmem:[%s3 + $0x1] sm:$0x1]
    %v159 = vlaneseq
    %v160 = vshrl.u32 %v159, 7
    %v161 = vsub.s32 0, %v160
    %v162 = vrot.slane %v158, %v161
    %163 = vmatprep.subr.mxu0 0.0
    %164 = vmatpush1.msra.mxu0 %v142
    %165 = vmatprep.subr.mxu0 0.0
    %166 = vmatpush1.msra.mxu0 %v143
    %167 = vmatprep.subr.mxu0 0.0
    %168 = vmatpush1.msra.mxu0 %v144
    %169 = vmatprep.subr.mxu0 0.0
    %170 = vmatpush1.msra.mxu0 %v145
    %171 = vmatprep.subr.mxu0 0.0
    %172 = vmatpush1.msra.mxu0 %v146
    %173 = vmatprep.subr.mxu0 0.0
    %174 = vmatpush1.msra.mxu0 %v147
    %175 = vmatprep.subr.mxu0 0.0
    %176 = vmatpush1.msra.mxu0 %v148
    %177 = vmatprep.subr.mxu0 0.0
    %178 = vmatpush1.msra.mxu0 %v149
    %179 = vmatprep.subr.mxu0 0.0
    %180 = vmatpush1.msra.mxu0 %v150
    %181 = vmatprep.subr.mxu0 0.0
    %182 = vmatpush1.msra.mxu0 %v151
    %183 = vmatprep.subr.mxu0 0.0
    %184 = vmatpush1.msra.mxu0 %v152
    %185 = vmatprep.subr.mxu0 0.0
    %186 = vmatpush1.msra.mxu0 %v153
    %187 = vmatprep.subr.mxu0 0.0
    %188 = vmatpush1.msra.mxu0 %v154
    %189 = vmatprep.subr.mxu0 0.0
    %190 = vmatpush1.msra.mxu0 %v155
    %191 = vmatprep.subr.mxu0 0.0
    %192 = vmatpush1.msra.mxu0 %v156
    %193 = vmatprep.subr.mxu0 0.0
    %194 = vmatpush1.msra.mxu0 %v157
    %195 = vmatprep.subr.mxu0 0.0
    %196 = vmatpush1.msra.mxu0 0.0
    %197 = vmatprep.subr.mxu0 0.0
    %198 = vmatpush1.msra.mxu0 0.0
    %199 = vmatprep.subr.mxu0 0.0
    %200 = vmatpush1.msra.mxu0 0.0
    %201 = vmatprep.subr.mxu0 0.0
    %202 = vmatpush1.msra.mxu0 0.0
    %203 = vmatprep.subr.mxu0 0.0
    %204 = vmatpush1.msra.mxu0 0.0
    %205 = vmatprep.subr.mxu0 0.0
    %206 = vmatpush1.msra.mxu0 0.0
    %207 = vmatprep.subr.mxu0 0.0
    %208 = vmatpush1.msra.mxu0 0.0
    %209 = vmatprep.subr.mxu0 0.0
    %210 = vmatpush1.msra.mxu0 0.0
    %211 = vmatprep.subr.mxu0 0.0
    %212 = vmatpush1.msra.mxu0 0.0
    %213 = vmatprep.subr.mxu0 0.0
    %214 = vmatpush1.msra.mxu0 0.0
    %215 = vmatprep.subr.mxu0 0.0
    %216 = vmatpush1.msra.mxu0 0.0
    %217 = vmatprep.subr.mxu0 0.0
    %218 = vmatpush1.msra.mxu0 0.0
    %219 = vmatprep.subr.mxu0 0.0
    %220 = vmatpush1.msra.mxu0 0.0
    %221 = vmatprep.subr.mxu0 0.0
    %222 = vmatpush1.msra.mxu0 0.0
    %223 = vmatprep.subr.mxu0 0.0
    %224 = vmatpush1.msra.mxu0 0.0
    %225 = vmatprep.subr.mxu0 0.0
    %226 = vmatpush1.msra.mxu0 0.0
    %227 = vmatprep.mubr.f32.mxu0 0.0
    %228 = vmatmul.mubr.f32.gmra.mrb[0].mxu0 %v141
    %v229 = vpop.f32.mrb[0].mxu0
    %v230 = vadd.f32 %v162, %v229
    %v231 = vpop.f32.mrb[0].mxu0
    %232 = vdwg.mxu0
    %v233 = vmax.f32 %v230, 0.0
    %s234 = scalar_lea.vmem [#allocation7], 128
    %v235 = vld [vmem:[%s234] sm:$0xff]
    %v236 = vld [vmem:[%s234 + $0x8] sm:$0xff]
    %v237 = vld [vmem:[%s234 + $0x10] sm:$0xff]
    %v238 = vld [vmem:[%s234 + $0x18] sm:$0xff]
    %v239 = vld [vmem:[%s234 + $0x20] sm:$0xff]
    %v240 = vld [vmem:[%s234 + $0x28] sm:$0xff]
    %v241 = vld [vmem:[%s234 + $0x30] sm:$0xff]
    %v242 = vld [vmem:[%s234 + $0x38] sm:$0xff]
    %v243 = vld [vmem:[%s234 + $0x40] sm:$0xff]
    %v244 = vld [vmem:[%s234 + $0x48] sm:$0xff]
    %v245 = vld [vmem:[%s234 + $0x50] sm:$0xff]
    %v246 = vld [vmem:[%s234 + $0x58] sm:$0xff]
    %v247 = vld [vmem:[%s234 + $0x60] sm:$0xff]
    %v248 = vld [vmem:[%s234 + $0x68] sm:$0xff]
    %v249 = vld [vmem:[%s234 + $0x70] sm:$0xff]
    %v250 = vld [vmem:[%s234 + $0x78] sm:$0xff]
    %v251 = vld [vmem:[%s3 + $0x2] sm:$0x1]
    %v252 = vlaneseq
    %v253 = vshrl.u32 %v252, 7
    %v254 = vsub.s32 0, %v253
    %v255 = vrot.slane %v251, %v254
    %256 = vmatprep.subr.mxu0 0.0
    %257 = vmatpush1.msra.mxu0 %v235
    %258 = vmatprep.subr.mxu0 0.0
    %259 = vmatpush1.msra.mxu0 %v236
    %260 = vmatprep.subr.mxu0 0.0
    %261 = vmatpush1.msra.mxu0 %v237
    %262 = vmatprep.subr.mxu0 0.0
    %263 = vmatpush1.msra.mxu0 %v238
    %264 = vmatprep.subr.mxu0 0.0
    %265 = vmatpush1.msra.mxu0 %v239
    %266 = vmatprep.subr.mxu0 0.0
    %267 = vmatpush1.msra.mxu0 %v240
    %268 = vmatprep.subr.mxu0 0.0
    %269 = vmatpush1.msra.mxu0 %v241
    %270 = vmatprep.subr.mxu0 0.0
    %271 = vmatpush1.msra.mxu0 %v242
    %272 = vmatprep.subr.mxu0 0.0
    %273 = vmatpush1.msra.mxu0 %v243
    %274 = vmatprep.subr.mxu0 0.0
    %275 = vmatpush1.msra.mxu0 %v244
    %276 = vmatprep.subr.mxu0 0.0
    %277 = vmatpush1.msra.mxu0 %v245
    %278 = vmatprep.subr.mxu0 0.0
    %279 = vmatpush1.msra.mxu0 %v246
    %280 = vmatprep.subr.mxu0 0.0
    %281 = vmatpush1.msra.mxu0 %v247
    %282 = vmatprep.subr.mxu0 0.0
    %283 = vmatpush1.msra.mxu0 %v248
    %284 = vmatprep.subr.mxu0 0.0
    %285 = vmatpush1.msra.mxu0 %v249
    %286 = vmatprep.subr.mxu0 0.0
    %287 = vmatpush1.msra.mxu0 %v250
    %288 = vmatprep.subr.mxu0 0.0
    %289 = vmatpush1.msra.mxu0 0.0
    %290 = vmatprep.subr.mxu0 0.0
    %291 = vmatpush1.msra.mxu0 0.0
    %292 = vmatprep.subr.mxu0 0.0
    %293 = vmatpush1.msra.mxu0 0.0
    %294 = vmatprep.subr.mxu0 0.0
    %295 = vmatpush1.msra.mxu0 0.0
    %296 = vmatprep.subr.mxu0 0.0
    %297 = vmatpush1.msra.mxu0 0.0
    %298 = vmatprep.subr.mxu0 0.0
    %299 = vmatpush1.msra.mxu0 0.0
    %300 = vmatprep.subr.mxu0 0.0
    %301 = vmatpush1.msra.mxu0 0.0
    %302 = vmatprep.subr.mxu0 0.0
    %303 = vmatpush1.msra.mxu0 0.0
    %304 = vmatprep.subr.mxu0 0.0
    %305 = vmatpush1.msra.mxu0 0.0
    %306 = vmatprep.subr.mxu0 0.0
    %307 = vmatpush1.msra.mxu0 0.0
    %308 = vmatprep.subr.mxu0 0.0
    %309 = vmatpush1.msra.mxu0 0.0
    %310 = vmatprep.subr.mxu0 0.0
    %311 = vmatpush1.msra.mxu0 0.0
    %312 = vmatprep.subr.mxu0 0.0
    %313 = vmatpush1.msra.mxu0 0.0
    %314 = vmatprep.subr.mxu0 0.0
    %315 = vmatpush1.msra.mxu0 0.0
    %316 = vmatprep.subr.mxu0 0.0
    %317 = vmatpush1.msra.mxu0 0.0
    %318 = vmatprep.subr.mxu0 0.0
    %319 = vmatpush1.msra.mxu0 0.0
    %320 = vmatprep.mubr.f32.mxu0 0.0
    %321 = vmatmul.mubr.f32.gmra.mrb[0].mxu0 %v233
    %v322 = vpop.f32.mrb[0].mxu0
    %v323 = vadd.f32 %v255, %v322
    %v324 = vpop.f32.mrb[0].mxu0
    %325 = vdwg.mxu0
    %326 = vst [vmem:[#allocation8] sm:$0xf] %v323
    // Predicated region
    $region30: #{_fused_forward.1} parent=1 // pred_check
      _
    $region31: #{_fused_forward.1} parent=1 // pred_check_branch
      %328 = sbr.rel (0) target = $region33
    $region32: #{_fused_forward.1} parent=1 // pred_region
      %s330 = ssub.s32 64, 64
      %331 = vsyncadd [#allocation4], %s330
      %s333 = sshll.u32 [#allocation8], 4
      %s334 = int_to_ptr.vmem [resolvable:$true] %s333
      %336 = dma.vmem_to_hbm [thread:$0]  %s334, 64, %s4, [#allocation4]
    $region33: #{_fused_forward.1} parent=1 // pred_fallthru
      _
    // Predicated region
    $region34: #{_fused_forward.1} parent=1 // pred_check
      _
    $region35: #{_fused_forward.1} parent=1 // pred_check_branch
      %338 = sbr.rel (0) target = $region37
    $region36: #{_fused_forward.1} parent=1 // pred_region
      %339 = dma.done [#allocation4], 64
    $region37: #{_fused_forward.1} parent=1 // pred_fallthru
      _
    %340 = vsyncpa [#allocation3], 1
    %341 = vsyncpa [#allocation6], 1
    %342 = vsyncpa [#allocation4], 1

</llo_original>
